<compile_context>
chip_gen: v5e
topology: v5e:2x2
jax: 0.10.0
libtpu: 0.0.40
codegen_flags: <defaults>
</compile_context>

<pallas_src>
import functools
import math

import jax
import jax.numpy as jnp
from jax.experimental import pallas as pl
from jax.experimental.pallas import tpu as pltpu


# Conservative for v7x (64 MiB physical per TensorCore) while above the
# 32 MiB default scoped limit.  Per-kernel budgets below stay well under it.
_VMEM_LIMIT = 48 * 1024 * 1024


def _pick_tile(dim, target, align):
    """Largest tile <= target that divides `dim` and keeps TPU tiling
    alignment.  Falls back to the full dim (always a legal block size)."""
    if dim <= target:
        return dim
    t = (target // align) * align
    while t >= align:
        if dim % t == 0:
            return t
        t -= align
    return dim


# ----------------------------------------------------------------------------
# Tiled dense:  o = act(x @ w + b)
#   x : [M, K] bf16 (or f32; cast to bf16 in-kernel for the MXU)
#   w : [K, N] bf16
#   b : [1, N] f32
# Epilogue math stays in f32; output cast at the store (bf16 by default).
# ----------------------------------------------------------------------------
def _dense_kernel(x_ref, w_ref, b_ref, o_ref, acc_ref, *, activation):
    k = pl.program_id(2)

    @pl.when(k == 0)
    def _():
        acc_ref[...] = jnp.zeros_like(acc_ref)

    acc_ref[...] += jnp.dot(
        x_ref[...].astype(jnp.bfloat16),
        w_ref[...],
        preferred_element_type=jnp.float32,
    )

    @pl.when(k == pl.num_programs(2) - 1)
    def _():
        y = acc_ref[...] + b_ref[...]
        if activation == "gelu":
            # exact (erf) GELU, matching HF BertIntermediate default (f32)
            y = 0.5 * y * (1.0 + jax.lax.erf(y * (1.0 / math.sqrt(2.0))))
        elif activation == "tanh":
            y = jnp.tanh(y)
        o_ref[...] = y.astype(o_ref.dtype)


def dense(x, w, b, activation="none", out_dtype=jnp.bfloat16, *,
          tm=512, tn=1024, tk=512):
    M, K = x.shape
    N = w.shape[1]
    tm = _pick_tile(M, tm, 16)     # bf16 sublane tiling
    tn = _pick_tile(N, tn, 128)
    tk = _pick_tile(K, tk, 128)
    grid = (M // tm, N // tn, K // tk)
    return pl.pallas_call(
        functools.partial(_dense_kernel, activation=activation),
        grid=grid,
        in_specs=[
            pl.BlockSpec((tm, tk), lambda i, j, k: (i, k)),
            pl.BlockSpec((tk, tn), lambda i, j, k: (k, j)),
            pl.BlockSpec((1, tn), lambda i, j, k: (0, j)),
        ],
        out_specs=pl.BlockSpec((tm, tn), lambda i, j, k: (i, j)),
        out_shape=jax.ShapeDtypeStruct((M, N), out_dtype),
        scratch_shapes=[pltpu.VMEM((tm, tn), jnp.float32)],
        compiler_params=pltpu.CompilerParams(
            dimension_semantics=("parallel", "parallel", "arbitrary"),
            vmem_limit_bytes=_VMEM_LIMIT,
        ),
    )(x, w, b.reshape(1, N))


# ----------------------------------------------------------------------------
# Fused dense + bias + residual-add + LayerNorm (tn = full N so the whole
# output row is resident at the final k step).  Used for the attention-output
# and FFN-output projections; removes two [M,H] HBM round trips per layer.
# ----------------------------------------------------------------------------
def _dense_ln_kernel(x_ref, w_ref, b_ref, r_ref, g_ref, bb_ref, o_ref,
                     acc_ref, *, eps):
    k = pl.program_id(1)

    @pl.when(k == 0)
    def _():
        acc_ref[...] = jnp.zeros_like(acc_ref)

    acc_ref[...] += jnp.dot(
        x_ref[...].astype(jnp.bfloat16),
        w_ref[...],
        preferred_element_type=jnp.float32,
    )

    @pl.when(k == pl.num_programs(1) - 1)
    def _():
        y = acc_ref[...] + b_ref[...] + r_ref[...].astype(jnp.float32)
        mean = jnp.mean(y, axis=-1, keepdims=True)
        var = jnp.mean(jnp.square(y - mean), axis=-1, keepdims=True)
        o_ref[...] = ((y - mean) * jax.lax.rsqrt(var + eps) * g_ref[...]
                      + bb_ref[...]).astype(o_ref.dtype)


def dense_ln(x, w, b, residual, gamma, beta, out_dtype=jnp.bfloat16, *,
             eps=1e-12, tm=512, tk=512):
    M, K = x.shape
    N = w.shape[1]
    tm = _pick_tile(M, tm, 16)
    tk = _pick_tile(K, tk, 128)
    grid = (M // tm, K // tk)
    return pl.pallas_call(
        functools.partial(_dense_ln_kernel, eps=eps),
        grid=grid,
        in_specs=[
            pl.BlockSpec((tm, tk), lambda i, k: (i, k)),
            pl.BlockSpec((tk, N), lambda i, k: (k, 0)),
            pl.BlockSpec((1, N), lambda i, k: (0, 0)),
            pl.BlockSpec((tm, N), lambda i, k: (i, 0)),
            pl.BlockSpec((1, N), lambda i, k: (0, 0)),
            pl.BlockSpec((1, N), lambda i, k: (0, 0)),
        ],
        out_specs=pl.BlockSpec((tm, N), lambda i, k: (i, 0)),
        out_shape=jax.ShapeDtypeStruct((M, N), out_dtype),
        scratch_shapes=[pltpu.VMEM((tm, N), jnp.float32)],
        compiler_params=pltpu.CompilerParams(
            dimension_semantics=("parallel", "arbitrary"),
            vmem_limit_bytes=_VMEM_LIMIT,
        ),
    )(x, w, b.reshape(1, N), residual, gamma.reshape(1, N), beta.reshape(1, N))


# ----------------------------------------------------------------------------
# Residual-add + LayerNorm (embedding path only).  Statistics in f32,
# bf16 output, large row tiles (HBM-bound kernel).
# ----------------------------------------------------------------------------
def _layernorm_kernel(x_ref, r_ref, g_ref, b_ref, o_ref, *, eps):
    x = x_ref[...].astype(jnp.float32) + r_ref[...].astype(jnp.float32)
    mean = jnp.mean(x, axis=-1, keepdims=True)
    var = jnp.mean(jnp.square(x - mean), axis=-1, keepdims=True)
    o_ref[...] = ((x - mean) * jax.lax.rsqrt(var + eps) * g_ref[...]
                  + b_ref[...]).astype(o_ref.dtype)


def layernorm(x, gamma, beta, residual, out_dtype=jnp.bfloat16, *,
              eps=1e-12, tm=512):
    M, H = x.shape
    tm = _pick_tile(M, tm, 16)
    row_spec = pl.BlockSpec((tm, H), lambda i: (i, 0))
    vec_spec = pl.BlockSpec((1, H), lambda i: (0, 0))
    return pl.pallas_call(
        functools.partial(_layernorm_kernel, eps=eps),
        grid=(M // tm,),
        in_specs=[row_spec, row_spec, vec_spec, vec_spec],
        out_specs=row_spec,
        out_shape=jax.ShapeDtypeStruct((M, H), out_dtype),
        compiler_params=pltpu.CompilerParams(
            dimension_semantics=("parallel",),
            vmem_limit_bytes=_VMEM_LIMIT,
        ),
    )(x, residual, gamma.reshape(1, H), beta.reshape(1, H))


# ----------------------------------------------------------------------------
# Fused multi-head attention.  Grid = (batch, query-tile); heads are sliced
# in-kernel from the fused bf16 QKV block ([S,3H], DMA'd once per batch
# element since its block index ignores the query axis).  Scores are [tq, S]
# per head, capping VMEM growth at long sequences (v7x 64 MiB budget).  Each
# head's context goes into a [tq, H] f32 VMEM scratch; one lane-dense bf16
# store per grid step.
# ----------------------------------------------------------------------------
def _attention_kernel(qkv_ref, mask_ref, o_ref, ctx_ref, *, nH, dh, tq, scale):
    H = nH * dh
    q0 = pl.multiple_of(pl.program_id(1) * tq, tq)
    mask = mask_ref[0]                                    # [1, S] additive f32
    # TODO(synk): the dh-wide q/k/v lane slices cross the 128-lane vreg tile
    # when dh < 128; inherent to the fused-QKV layout (head-major layout would
    # trade it for two [B,S,3H]-sized XLA transposes per layer).
    for h in range(nH):
        q = qkv_ref[0, pl.ds(q0, tq), pl.ds(h * dh, dh)]          # [tq, dh]
        k = qkv_ref[0, :, pl.ds(H + h * dh, dh)]                  # [S, dh]
        v = qkv_ref[0, :, pl.ds(2 * H + h * dh, dh)]              # [S, dh]
        # contract the dh axis of both operands (trans_b form, no explicit K^T)
        s = jax.lax.dot_general(
            q, k, (((1,), (1,)), ((), ())),
            preferred_element_type=jnp.float32) * scale
        s = s + mask
        s = s - jnp.max(s, axis=-1, keepdims=True)
        p = jnp.exp(s)
        p = p * pl.reciprocal(jnp.sum(p, axis=-1, keepdims=True), approx=True)
        ctx_ref[:, h * dh:(h + 1) * dh] = jnp.dot(
            p.astype(jnp.bfloat16), v, preferred_element_type=jnp.float32)
    # single lane-dense store of the merged-head context [tq, H]
    o_ref[0] = ctx_ref[...].astype(o_ref.dtype)


def attention(qkv, ext_mask, *, nH, tq_target=256):
    B, S, threeH = qkv.shape
    H = threeH // 3
    dh = H // nH
    tq = _pick_tile(S, tq_target, 16)
    scale = 1.0 / math.sqrt(dh)
    return pl.pallas_call(
        functools.partial(_attention_kernel, nH=nH, dh=dh, tq=tq, scale=scale),
        grid=(B, S // tq),
        in_specs=[
            pl.BlockSpec((1, S, threeH), lambda b, qi: (b, 0, 0)),
            pl.BlockSpec((1, 1, S), lambda b, qi: (b, 0, 0)),
        ],
        out_specs=pl.BlockSpec((1, tq, H), lambda b, qi: (b, qi, 0)),
        out_shape=jax.ShapeDtypeStruct((B, S, H), jnp.bfloat16),
        scratch_shapes=[pltpu.VMEM((tq, H), jnp.float32)],
        compiler_params=pltpu.CompilerParams(
            dimension_semantics=("parallel", "parallel"),
            vmem_limit_bytes=_VMEM_LIMIT,
        ),
    )(qkv, ext_mask)


# ----------------------------------------------------------------------------
# Parameter construction (deterministic, synthetic).  Matmul weights stored
# in bf16 (halves weight HBM traffic, feeds the bf16 MXU); everything
# elementwise stays f32.
# ----------------------------------------------------------------------------
def make_params(key, *, vocab, max_pos, type_vocab, H, nL, inter):
    def nxt():
        nonlocal key
        key, sub = jax.random.split(key)
        return sub

    def w(shape):
        return 0.02 * jax.random.normal(nxt(), shape, dtype=jnp.float32)

    def wb(shape):
        return w(shape).astype(jnp.bfloat16)

    params = {
        "word_emb": w((vocab, H)),
        "pos_emb": w((max_pos, H)),
        "type_emb": w((type_vocab, H)),
        "emb_ln_g": jnp.ones((H,), jnp.float32),
        "emb_ln_b": jnp.zeros((H,), jnp.float32),
        "pool_w": wb((H, H)),
        "pool_b": jnp.zeros((H,), jnp.float32),
        "layers": [],
    }
    for _ in range(nL):
        params["layers"].append({
            # fused Q|K|V projection
            "wqkv": wb((H, 3 * H)), "bqkv": jnp.zeros((3 * H,), jnp.float32),
            "wo": wb((H, H)), "bo": jnp.zeros((H,), jnp.float32),
            "ln1_g": jnp.ones((H,), jnp.float32),
            "ln1_b": jnp.zeros((H,), jnp.float32),
            "wi": wb((H, inter)), "bi": jnp.zeros((inter,), jnp.float32),
            "wo2": wb((inter, H)), "bo2": jnp.zeros((H,), jnp.float32),
            "ln2_g": jnp.ones((H,), jnp.float32),
            "ln2_b": jnp.zeros((H,), jnp.float32),
        })
    return params


# ----------------------------------------------------------------------------
# BERT forward (glue in JAX, hot paths in Pallas)
# ----------------------------------------------------------------------------
def bert_forward(params, input_ids, token_type_ids, attention_mask, *, nH):
    B, S = input_ids.shape
    H = params["word_emb"].shape[1]

    # --- embeddings: gathers stay in XLA (glue); add + LayerNorm fused ---
    # TODO(synk): fuse the embedding gather itself via PrefetchScalarGridSpec
    # row-gather to avoid materializing the [B,S,H] intermediates.
    emb = params["word_emb"][input_ids] + params["type_emb"][token_type_ids]
    pos = jnp.broadcast_to(params["pos_emb"][jnp.arange(S)][None], (B, S, H))
    h = layernorm(emb.reshape(B * S, H), params["emb_ln_g"],
                  params["emb_ln_b"], residual=pos.reshape(B * S, H),
                  out_dtype=jnp.bfloat16)                         # [B*S, H] bf16

    # additive mask [B, 1, S]
    ext_mask = (1.0 - attention_mask.astype(jnp.float32))[:, None, :] * -1e4

    nL = len(params["layers"])
    for li, lp in enumerate(params["layers"]):
        x = h                                                     # [B*S, H] bf16
        qkv = dense(x, lp["wqkv"], lp["bqkv"],
                    out_dtype=jnp.bfloat16)                       # [B*S, 3H]
        ctx = attention(qkv.reshape(B, S, 3 * H), ext_mask, nH=nH)  # [B,S,H] bf16
        # attention output projection fused with residual-add + LayerNorm
        h = dense_ln(ctx.reshape(B * S, H), lp["wo"], lp["bo"],
                     residual=x, gamma=lp["ln1_g"], beta=lp["ln1_b"],
                     out_dtype=jnp.bfloat16)

        inter_act = dense(h, lp["wi"], lp["bi"], activation="gelu",
                          out_dtype=jnp.bfloat16)                 # [B*S, inter]
        # FFN output projection fused with residual-add + LayerNorm
        h = dense_ln(inter_act, lp["wo2"], lp["bo2"],
                     residual=h, gamma=lp["ln2_g"], beta=lp["ln2_b"],
                     out_dtype=jnp.float32 if li == nL - 1 else jnp.bfloat16)

    last_hidden = h.reshape(B, S, H)                              # f32
    # pooler: tanh(dense(h[:, 0]))
    pooled = dense(last_hidden[:, 0, :], params["pool_w"], params["pool_b"],
                   activation="tanh", out_dtype=jnp.float32)
    return last_hidden, pooled  # (last_hidden_state, pooler_output)


# ----------------------------------------------------------------------------
if __name__ == "__main__":
    # TODO(synk): regex preprocessing + BertTokenizer (string ops) have no
    # tensor equivalent; we start from deterministic integer token ids.
    B, S, H, nH, nL, inter = 2, 8, 32, 2, 2, 64
    vocab, max_pos, type_vocab = 30, 16, 2

    key = jax.random.PRNGKey(0)
    key, pkey, ikey = jax.random.split(key, 3)

    params = make_params(pkey, vocab=vocab, max_pos=max_pos,
                         type_vocab=type_vocab, H=H, nL=nL, inter=inter)

    input_ids = jax.random.randint(ikey, (B, S), 0, vocab, dtype=jnp.int32)
    token_type_ids = jnp.zeros((B, S), jnp.int32)
    attention_mask = jnp.ones((B, S), jnp.int32)

    last_hidden, pooled = bert_forward(params, input_ids, token_type_ids,
                                       attention_mask, nH=nH)
    jax.block_until_ready((last_hidden, pooled))

    assert last_hidden.shape == (B, S, H)
    assert pooled.shape == (B, H)
    assert bool(jnp.all(jnp.isfinite(last_hidden)))
    assert bool(jnp.all(jnp.isfinite(pooled)))
    print("KERNEL_OK")
</pallas_src>

<mosaic_0001>
module attributes {stable_mosaic.version = 11 : i64} {
  func.func @_layernorm_kernel(%arg0: i32, %arg1: memref<16x32xf32, #tpu.memory_space<vmem>>, %arg2: memref<16x32xf32, #tpu.memory_space<vmem>>, %arg3: memref<1x32xf32, #tpu.memory_space<vmem>>, %arg4: memref<1x32xf32, #tpu.memory_space<vmem>>, %arg5: memref<16x32xbf16, #tpu.memory_space<vmem>>) attributes {dimension_semantics = [#tpu.dimension_semantics<parallel>], iteration_bounds = array<i64: 1>, scalar_prefetch = 0 : i64, scratch_operands = 0 : i64, tpu.core_type = #tpu.core_type<tc>, window_params = [{transform_indices = @transform_0, window_bounds = array<i64: 16, 32>}, {transform_indices = @transform_1, window_bounds = array<i64: 16, 32>}, {pipeline_mode = #tpu.pipeline_mode<synchronous>, transform_indices = @transform_2, window_bounds = array<i64: 1, 32>}, {pipeline_mode = #tpu.pipeline_mode<synchronous>, transform_indices = @transform_3, window_bounds = array<i64: 1, 32>}, {transform_indices = @transform_4, window_bounds = array<i64: 16, 32>}]} {
    %c0 = arith.constant 0 : index
    %c0_0 = arith.constant 0 : index
    %0 = vector.load %arg1[%c0, %c0_0] : memref<16x32xf32, #tpu.memory_space<vmem>>, vector<16x32xf32>
    %c0_1 = arith.constant 0 : index
    %c0_2 = arith.constant 0 : index
    %1 = vector.load %arg2[%c0_1, %c0_2] : memref<16x32xf32, #tpu.memory_space<vmem>>, vector<16x32xf32>
    %2 = arith.addf %0, %1 : vector<16x32xf32>
    %cst = arith.constant dense<0.000000e+00> : vector<16xf32>
    %3 = vector.multi_reduction <add>, %2, %cst [1] : vector<16x32xf32> to vector<16xf32>
    %4 = vector.shape_cast %3 : vector<16xf32> to vector<16x1xf32>
    %cst_3 = arith.constant 3.200000e+01 : f32
    %5 = vector.broadcast %cst_3 : f32 to vector<16x1xf32>
    %6 = arith.divf %4, %5 : vector<16x1xf32>
    %7 = vector.broadcast %6 : vector<16x1xf32> to vector<16x32xf32>
    %8 = arith.subf %2, %7 : vector<16x32xf32>
    %9 = arith.mulf %8, %8 : vector<16x32xf32>
    %cst_4 = arith.constant dense<0.000000e+00> : vector<16xf32>
    %10 = vector.multi_reduction <add>, %9, %cst_4 [1] : vector<16x32xf32> to vector<16xf32>
    %11 = vector.shape_cast %10 : vector<16xf32> to vector<16x1xf32>
    %cst_5 = arith.constant 3.200000e+01 : f32
    %12 = vector.broadcast %cst_5 : f32 to vector<16x1xf32>
    %13 = arith.divf %11, %12 : vector<16x1xf32>
    %14 = vector.broadcast %6 : vector<16x1xf32> to vector<16x32xf32>
    %15 = arith.subf %2, %14 : vector<16x32xf32>
    %cst_6 = arith.constant 9.99999996E-13 : f32
    %16 = vector.broadcast %cst_6 : f32 to vector<16x1xf32>
    %17 = arith.addf %13, %16 : vector<16x1xf32>
    %18 = math.rsqrt %17 : vector<16x1xf32>
    %19 = vector.broadcast %18 : vector<16x1xf32> to vector<16x32xf32>
    %20 = arith.mulf %15, %19 : vector<16x32xf32>
    %c0_7 = arith.constant 0 : index
    %c0_8 = arith.constant 0 : index
    %21 = vector.load %arg3[%c0_7, %c0_8] : memref<1x32xf32, #tpu.memory_space<vmem>>, vector<1x32xf32>
    %22 = vector.broadcast %21 : vector<1x32xf32> to vector<16x32xf32>
    %23 = arith.mulf %20, %22 : vector<16x32xf32>
    %c0_9 = arith.constant 0 : index
    %c0_10 = arith.constant 0 : index
    %24 = vector.load %arg4[%c0_9, %c0_10] : memref<1x32xf32, #tpu.memory_space<vmem>>, vector<1x32xf32>
    %25 = vector.broadcast %24 : vector<1x32xf32> to vector<16x32xf32>
    %26 = arith.addf %23, %25 : vector<16x32xf32>
    %27 = arith.truncf %26 : vector<16x32xf32> to vector<16x32xbf16>
    %c0_11 = arith.constant 0 : index
    %c0_12 = arith.constant 0 : index
    %28 = vector.load %arg5[%c0_11, %c0_12] : memref<16x32xbf16, #tpu.memory_space<vmem>>, vector<16x32xbf16>
    tpu.vector_store %arg5[%c0_11, %c0_12], %27 {strides = array<i32>} : memref<16x32xbf16, #tpu.memory_space<vmem>>, vector<16x32xbf16>,
    return
  }
  func.func @transform_0(%arg0: i32) -> (i32, i32) {
    %c0_i32 = arith.constant 0 : i32
    %c0_i32_0 = arith.constant 0 : i32
    return %arg0, %c0_i32 : i32, i32
  }
  func.func @transform_1(%arg0: i32) -> (i32, i32) {
    %c0_i32 = arith.constant 0 : i32
    %c0_i32_0 = arith.constant 0 : i32
    return %arg0, %c0_i32 : i32, i32
  }
  func.func @transform_2(%arg0: i32) -> (i32, i32) {
    %c0_i32 = arith.constant 0 : i32
    %c0_i32_0 = arith.constant 0 : i32
    %c0_i32_1 = arith.constant 0 : i32
    return %c0_i32, %c0_i32_0 : i32, i32
  }
  func.func @transform_3(%arg0: i32) -> (i32, i32) {
    %c0_i32 = arith.constant 0 : i32
    %c0_i32_0 = arith.constant 0 : i32
    %c0_i32_1 = arith.constant 0 : i32
    return %c0_i32, %c0_i32_0 : i32, i32
  }
  func.func @transform_4(%arg0: i32) -> (i32, i32) {
    %c0_i32 = arith.constant 0 : i32
    %c0_i32_0 = arith.constant 0 : i32
    return %arg0, %c0_i32 : i32, i32
  }
}

</mosaic_0001>

<llo_original>
// kernel: tpu_custom_call.1
$region0: #{tpu_custom_call.1}
  #allocation0 [shape = 'u32[]', space=smem, size = 0x4, offset = 0x4, fixed_abs, tag = 'smem constant byte address 0x4 - core index']
  #allocation1 [shape = 'u32[72,128]{1,0:T(1,128)}', space=vmem, size = 0x9000, scoped, tag = 'internal scratch']
  %s0 = inlined_call_operand.hbm [shape: f32[16,32], index: 0, kind: input, shape index: {}]
  %s1 = inlined_call_operand.hbm [shape: f32[16,32], index: 1, kind: input, shape index: {}]
  %s2 = inlined_call_operand.vmem [shape: f32[1,32], index: 2, kind: input, shape index: {}]
  %s3 = inlined_call_operand.vmem [shape: f32[1,32], index: 3, kind: input, shape index: {}]
  %s4 = inlined_call_operand.hbm [shape: bf16[16,32], index: 4, kind: output, shape index: {}]
  %s5 = sld [smem:[#allocation0]]
  $region34: #{tpu_custom_call.1} parent=0
    _
  %s7 = ssub.s32 1, %s5
  %s8 = scalar_select 0, %s7, %s5
  $region1: #{tpu_custom_call.1} parent=0
    #allocation2 [shape = 'u8[8192]{0}', space=vmem, size = 0x2000, scoped, tag = 'input window, operand 0, single buffered']
    #allocation3 [shape = 's32[1]{0}', space=sflag, size = 0x4, scoped, tag = 'scoped memory for tpu_custom_call.1']
    #allocation4 [shape = 's32[1]{0}', space=sflag, size = 0x4, scoped, tag = 'scoped memory for tpu_custom_call.1']
    #allocation5 [shape = 'u8[8192]{0}', space=vmem, size = 0x2000, scoped, tag = 'input window, operand 1, single buffered']
    #allocation6 [shape = 's32[1]{0}', space=sflag, size = 0x4, scoped, tag = 'scoped memory for tpu_custom_call.1']
    #allocation7 [shape = 'u8[4096]{0}', space=vmem, size = 0x1000, scoped, tag = 'output window, operand 0, single buffered']
    %9 = vsyncpa [#allocation3], 0
    %10 = vsyncpa [#allocation6], 0
    %11 = vsyncpa [#allocation4], 0
    // Predicated region
    $region2: #{tpu_custom_call.1} parent=1 // pred_check
      _
    $region3: #{tpu_custom_call.1} parent=1 // pred_check_branch
      %13 = sbr.rel (0) target = $region5
    $region4: #{tpu_custom_call.1} parent=1 // pred_region
      %15 = vsyncadd [#allocation3], 0
      %s16 = sshll.u32 %s0, 4
      %s17 = int_to_ptr.hbm [resolvable:$true] %s16
      %s18 = sshll.u32 [#allocation2], 4
      %s19 = int_to_ptr.vmem [resolvable:$true] %s18
      %24 = dma.hbm_to_vmem [thread:$0]  %s17, 256, %s19, [#allocation3], 128, 128, 8
    $region5: #{tpu_custom_call.1} parent=1 // pred_fallthru
      _
    // Predicated region
    $region6: #{tpu_custom_call.1} parent=1 // pred_check
      _
    $region7: #{tpu_custom_call.1} parent=1 // pred_check_branch
      %26 = sbr.rel (0) target = $region9
    $region8: #{tpu_custom_call.1} parent=1 // pred_region
      %28 = vsyncadd [#allocation6], 0
      %s29 = sshll.u32 %s1, 4
      %s30 = int_to_ptr.hbm [resolvable:$true] %s29
      %s31 = sshll.u32 [#allocation5], 4
      %s32 = int_to_ptr.vmem [resolvable:$true] %s31
      %37 = dma.hbm_to_vmem [thread:$0]  %s30, 256, %s32, [#allocation6], 128, 128, 8
    $region9: #{tpu_custom_call.1} parent=1 // pred_fallthru
      _
    // Predicated region
    $region10: #{tpu_custom_call.1} parent=1 // pred_check
      _
    $region11: #{tpu_custom_call.1} parent=1 // pred_check_branch
      %39 = sbr.rel (0) target = $region13
    $region12: #{tpu_custom_call.1} parent=1 // pred_region
      _
    $region13: #{tpu_custom_call.1} parent=1 // pred_fallthru
      _
    // Predicated region
    $region14: #{tpu_custom_call.1} parent=1 // pred_check
      _
    $region15: #{tpu_custom_call.1} parent=1 // pred_check_branch
      %41 = sbr.rel (0) target = $region17
    $region16: #{tpu_custom_call.1} parent=1 // pred_region
      _
    $region17: #{tpu_custom_call.1} parent=1 // pred_fallthru
      _
    // Predicated region
    $region18: #{tpu_custom_call.1} parent=1 // pred_check
      _
    $region19: #{tpu_custom_call.1} parent=1 // pred_check_branch
      %43 = sbr.rel (0) target = $region21
    $region20: #{tpu_custom_call.1} parent=1 // pred_region
      %45 = dma.done [#allocation3], 256
    $region21: #{tpu_custom_call.1} parent=1 // pred_fallthru
      _
    // Predicated region
    $region22: #{tpu_custom_call.1} parent=1 // pred_check
      _
    $region23: #{tpu_custom_call.1} parent=1 // pred_check_branch
      %47 = sbr.rel (0) target = $region25
    $region24: #{tpu_custom_call.1} parent=1 // pred_region
      %49 = dma.done [#allocation6], 256
    $region25: #{tpu_custom_call.1} parent=1 // pred_fallthru
      _
    %v50 = vld [vmem:[#allocation2] sm:$0xff]
    %v51 = vld [vmem:[#allocation2 + $0x8] sm:$0xff]
    %v52 = vld [vmem:[#allocation5] sm:$0xff]
    %v53 = vld [vmem:[#allocation5 + $0x8] sm:$0xff]
    %v54 = vadd.f32 %v50, %v52
    %v55 = vadd.f32 %v51, %v53
    %vm56 = vcmask 261120
    %v57 = vsel %vm56, %v54, 0.0
    %58 = vadd.xlane.f32.xlu0 %v57
    %v59 = vpop.xlane.xlu0 %58
    %v60 = vsel %vm56, %v55, 0.0
    %61 = vadd.xlane.f32.xlu0 %v60
    %v62 = vpop.xlane.xlu0 %61
    %v63 = vrcp.pop 32.0
    %v64 = vmul.f32 32.0, %v63
    %v65 = vsub.f32 1.0, %v64
    %v66 = vmul.f32 %v63, %v65
    %v67 = vadd.f32 %v63, %v66
    %vm68 = vweird.f32 %v63
    %v69 = vsel %vm68, %v63, %v67
    %v70 = vmul.f32 %v59, %v69
    %v71 = vmul.f32 %v62, %v69
    %v72 = vsub.f32 %v54, %v70
    %v73 = vsub.f32 %v55, %v71
    %v74 = vmul.f32 %v72, %v72
    %v75 = vmul.f32 %v73, %v73
    %v76 = vsel %vm56, %v74, 0.0
    %77 = vadd.xlane.f32.xlu0 %v76
    %v78 = vpop.xlane.xlu0 %77
    %v79 = vsel %vm56, %v75, 0.0
    %80 = vadd.xlane.f32.xlu0 %v79
    %v81 = vpop.xlane.xlu0 %80
    %v82 = vmul.f32 %v78, %v69
    %v83 = vmul.f32 %v81, %v69
    %v84 = vadd.f32 %v82, 1e-12
    %v85 = vadd.f32 %v83, 1e-12
    %v86 = vrsqrt.pop %v84
    %v87 = vmul.f32 %v86, %v84
    %v88 = vmul.f32 %v87, %v86
    %v89 = vmul.f32 0.5, %v88
    %v90 = vsub.f32 1.5, %v89
    %v91 = vmul.f32 %v86, %v90
    %vm92 = vweird.f32 %v84
    %vm93 = vweird.f32 %v86
    %vm94 = vmor %vm92, %vm93
    %v95 = vsel %vm94, %v86, %v91
    %v96 = vrsqrt.pop %v85
    %v97 = vmul.f32 %v96, %v85
    %v98 = vmul.f32 %v97, %v96
    %v99 = vmul.f32 0.5, %v98
    %v100 = vsub.f32 1.5, %v99
    %v101 = vmul.f32 %v96, %v100
    %vm102 = vweird.f32 %v85
    %vm103 = vweird.f32 %v96
    %vm104 = vmor %vm102, %vm103
    %v105 = vsel %vm104, %v96, %v101
    %v106 = vmul.f32 %v72, %v95
    %v107 = vmul.f32 %v73, %v105
    %v108 = vld [vmem:[%s2] sm:$0x1]
    %v110 = vperm.slane %v108, 0
    %v112 = vmul.f32 %v106, %v110
    %v113 = vmul.f32 %v107, %v110
    %v114 = vld [vmem:[%s3] sm:$0x1]
    %v116 = vperm.slane %v114, 0
    %v118 = vadd.f32 %v112, %v116
    %v119 = vadd.f32 %v113, %v116
    %v120 = vpack.c.bf16 %v118, %v118
    %v121 = vpack.c.bf16 %v119, %v119
    %vm122 = vcmask 257024
    %123 = vst.msk [vmem:[#allocation7] sm:$0xf] %vm122, %v120
    %124 = vst.msk [vmem:[#allocation7 + $0x4] sm:$0xf] %vm122, %v121
    // Predicated region
    $region26: #{tpu_custom_call.1} parent=1 // pred_check
      _
    $region27: #{tpu_custom_call.1} parent=1 // pred_check_branch
      %126 = sbr.rel (0) target = $region29
    $region28: #{tpu_custom_call.1} parent=1 // pred_region
      %128 = vsyncadd [#allocation4], 0
      %s129 = sshll.u32 [#allocation7], 4
      %s130 = int_to_ptr.vmem [resolvable:$true] %s129
      %s131 = sshll.u32 %s4, 4
      %s132 = int_to_ptr.hbm [resolvable:$true] %s131
      %137 = dma.vmem_to_hbm [thread:$0]  %s130, 128, %s132, [#allocation4], 64, 64, 4
    $region29: #{tpu_custom_call.1} parent=1 // pred_fallthru
      _
    // Predicated region
    $region30: #{tpu_custom_call.1} parent=1 // pred_check
      _
    $region31: #{tpu_custom_call.1} parent=1 // pred_check_branch
      %139 = sbr.rel (0) target = $region33
    $region32: #{tpu_custom_call.1} parent=1 // pred_region
      %141 = dma.done [#allocation4], 128
    $region33: #{tpu_custom_call.1} parent=1 // pred_fallthru
      _
    %142 = vsyncpa [#allocation3], 1
    %143 = vsyncpa [#allocation6], 1
    %144 = vsyncpa [#allocation4], 1

</llo_original>
